<compile_context>
chip_gen: v6e
topology: v6e:2x2x1
jax: 0.10.0
libtpu: 0.0.40
codegen_flags: <defaults>
</compile_context>

<pallas_src>
import jax
import jax.numpy as jnp
from jax.experimental import pallas as pl
from jax.experimental.pallas import tpu as pltpu


def _line_kernel(w_ref, b_ref, x_ref, o_ref):
    # w_ref, b_ref: shape-(1,) f32 scalars in SMEM; x_ref/o_ref: lane-dense VMEM tiles.
    w = w_ref[0]
    b = b_ref[0]
    o_ref[...] = (w * x_ref[...] + b).astype(o_ref.dtype)


def _vmem_capacity_bytes():
    try:
        return int(pltpu.get_tpu_info().vmem_capacity_bytes)
    except Exception:
        return None


def _pick_lane_width(n):
    for c in (512, 256, 128):
        if n % c == 0:
            return c
    return None


def _line_pallas(x2d, w32, b32, out_dtype):
    """Run the elementwise affine kernel on a lane-dense (R, C) slab."""
    R, C = x2d.shape
    in_item = jnp.dtype(x2d.dtype).itemsize
    out_item = jnp.dtype(out_dtype).itemsize
    # Packed-sublane multiple: 8 for 32-bit, 16 for 16-bit, 32 for 8-bit dtypes.
    pack = 8 * max(1, 4 // min(in_item, out_item))

    # Generation-aware tile / VMEM-limit selection.
    vmem_cap = _vmem_capacity_bytes()
    if vmem_cap is not None and vmem_cap <= (64 << 20):      # v7x-class (64 MiB VMEM)
        target_tile_bytes = 6 << 20
        vmem_limit = 48 << 20
    elif vmem_cap is not None:                               # v5e / v6e (128 MiB VMEM)
        target_tile_bytes = 4 << 20
        vmem_limit = 64 << 20
    else:                                                    # unknown: stay conservative
        target_tile_bytes = 4 << 20
        vmem_limit = 32 << 20

    bytes_per_row = C * in_item
    tile_rows = max(pack, (target_tile_bytes // bytes_per_row) // pack * pack)
    tile_rows = min(tile_rows, R)
    # If a single tile would swallow the whole slab but there's enough work to
    # split, force >= 2 grid steps so the "parallel" axis can be megacore-sharded
    # on v7x (harmless on single-TC v5e/v6e).
    if pl.cdiv(R, tile_rows) < 2 and R >= 2 * pack:
        tile_rows = max(pack, ((R // 2) // pack) * pack)
    grid = (pl.cdiv(R, tile_rows),)

    return pl.pallas_call(
        _line_kernel,
        out_shape=jax.ShapeDtypeStruct((R, C), out_dtype),
        grid=grid,
        in_specs=[
            pl.BlockSpec(memory_space=pltpu.SMEM),            # w  (scalar param)
            pl.BlockSpec(memory_space=pltpu.SMEM),            # b  (scalar param)
            pl.BlockSpec((tile_rows, C), lambda i: (i, 0)),   # x  tile
        ],
        out_specs=pl.BlockSpec((tile_rows, C), lambda i: (i, 0)),
        compiler_params=pltpu.CompilerParams(
            dimension_semantics=("parallel",),
            vmem_limit_bytes=vmem_limit,
        ),
    )(w32, b32, x2d)


def line_forward(x, w, b):
    """Compute w * x + b with torch-style broadcasting/promotion (scalar params)."""
    orig_shape = x.shape
    out_dtype = jnp.result_type(x.dtype, jnp.asarray(w).dtype, jnp.asarray(b).dtype)
    total = x.size

    # SMEM is a 32-bit scalar path: always present params as f32 shape-(1,).
    w32 = jnp.asarray(w, jnp.float32).reshape(-1)[:1]
    b32 = jnp.asarray(b, jnp.float32).reshape(-1)[:1]

    flat = jnp.ravel(x)

    if total < 128:
        # Too small for a lane-dense tile; a kernel launch would be pure overhead.
        return (w32[0] * flat + b32[0]).astype(out_dtype).reshape(orig_shape)

    C = _pick_lane_width(total)
    if C is not None:
        # Common case: total divisible by 128 -> zero-copy reshape, no pad, no slice.
        main = total
        tail = None
    else:
        # Ragged: run the kernel on the 128-aligned prefix, handle the <128-elem
        # tail in plain JAX instead of padding/slicing full HBM copies.
        main = (total // 128) * 128
        C = _pick_lane_width(main)
        tail = flat[main:]

    x_main = flat if main == total else flat[:main]
    x2d = x_main.reshape(main // C, C)

    main_out = _line_pallas(x2d, w32, b32, out_dtype)

    if tail is None:
        return main_out.reshape(orig_shape)

    tail_out = (w32[0] * tail + b32[0]).astype(out_dtype)
    return jnp.concatenate([main_out.reshape(-1), tail_out]).reshape(orig_shape)


if __name__ == "__main__":
    key = jax.random.PRNGKey(0)
    kx, kw, kb, kx2, kx3 = jax.random.split(key, 5)

    # Deterministic "parameters" (torch.rand(1) -> uniform[0,1) scalars of shape [1]).
    w = jax.random.uniform(kw, (1,), dtype=jnp.float32)
    b = jax.random.uniform(kb, (1,), dtype=jnp.float32)

    # Small input consistent with the module's elementwise forward (no pad path).
    x = jax.random.normal(kx, (16, 128), dtype=jnp.float32)
    out = jax.block_until_ready(line_forward(x, w, b))
    ref = w * x + b
    assert out.shape == x.shape and out.dtype == ref.dtype
    assert jnp.allclose(out, ref, atol=1e-6, rtol=1e-6)

    # Ragged shape to exercise the aligned-prefix + JAX-tail path.
    x2 = jax.random.normal(kx2, (7, 33), dtype=jnp.float32)
    out2 = jax.block_until_ready(line_forward(x2, w, b))
    ref2 = w * x2 + b
    assert out2.shape == x2.shape and out2.dtype == ref2.dtype
    assert jnp.allclose(out2, ref2, atol=1e-6, rtol=1e-6)

    # Slightly larger (still small) input to exercise the multi-step parallel grid.
    x3 = jax.random.normal(kx3, (64, 512), dtype=jnp.float32)
    out3 = jax.block_until_ready(line_forward(x3, w, b))
    ref3 = w * x3 + b
    assert out3.shape == x3.shape and out3.dtype == ref3.dtype
    assert jnp.allclose(out3, ref3, atol=1e-6, rtol=1e-6)

    print("KERNEL_OK")
</pallas_src>

<mosaic_0001>
module attributes {stable_mosaic.version = 11 : i64} {
  func.func @_line_kernel(%arg0: i32, %arg1: memref<1xf32, #tpu.memory_space<smem>>, %arg2: memref<1xf32, #tpu.memory_space<smem>>, %arg3: memref<4x512xf32, #tpu.memory_space<vmem>>, %arg4: memref<4x512xf32, #tpu.memory_space<vmem>>) attributes {dimension_semantics = [#tpu.dimension_semantics<parallel>], iteration_bounds = array<i64: 1>, scalar_prefetch = 0 : i64, scratch_operands = 0 : i64, tpu.core_type = #tpu.core_type<tc>, window_params = [{transform_indices = @transform_0, window_bounds = array<i64: 1>}, {transform_indices = @transform_1, window_bounds = array<i64: 1>}, {transform_indices = @transform_2, window_bounds = array<i64: 4, 512>}, {transform_indices = @transform_3, window_bounds = array<i64: 4, 512>}]} {
    %c0 = arith.constant 0 : index
    %0 = memref.load %arg1[%c0] : memref<1xf32, #tpu.memory_space<smem>>
    %c0_0 = arith.constant 0 : index
    %1 = memref.load %arg2[%c0_0] : memref<1xf32, #tpu.memory_space<smem>>
    %c0_1 = arith.constant 0 : index
    %c0_2 = arith.constant 0 : index
    %2 = vector.load %arg3[%c0_1, %c0_2] : memref<4x512xf32, #tpu.memory_space<vmem>>, vector<4x512xf32>
    %3 = vector.broadcast %0 : f32 to vector<4x512xf32>
    %4 = arith.mulf %3, %2 : vector<4x512xf32>
    %5 = vector.broadcast %1 : f32 to vector<4x512xf32>
    %6 = arith.addf %4, %5 : vector<4x512xf32>
    %c0_3 = arith.constant 0 : index
    %c0_4 = arith.constant 0 : index
    %7 = vector.load %arg4[%c0_3, %c0_4] : memref<4x512xf32, #tpu.memory_space<vmem>>, vector<4x512xf32>
    tpu.vector_store %arg4[%c0_3, %c0_4], %6 {strides = array<i32>} : memref<4x512xf32, #tpu.memory_space<vmem>>, vector<4x512xf32>,
    return
  }
  func.func @transform_0(%arg0: i32) -> i32 {
    %c0_i32 = arith.constant 0 : i32
    %c0_i32_0 = arith.constant 0 : i32
    return %c0_i32 : i32
  }
  func.func @transform_1(%arg0: i32) -> i32 {
    %c0_i32 = arith.constant 0 : i32
    %c0_i32_0 = arith.constant 0 : i32
    return %c0_i32 : i32
  }
  func.func @transform_2(%arg0: i32) -> (i32, i32) {
    %c0_i32 = arith.constant 0 : i32
    %c0_i32_0 = arith.constant 0 : i32
    return %arg0, %c0_i32 : i32, i32
  }
  func.func @transform_3(%arg0: i32) -> (i32, i32) {
    %c0_i32 = arith.constant 0 : i32
    %c0_i32_0 = arith.constant 0 : i32
    return %arg0, %c0_i32 : i32, i32
  }
}

</mosaic_0001>

<llo_original>
// kernel: tpu_custom_call.1
$region0: #{tpu_custom_call.1}
  #allocation0 [shape = 'u32[]', space=smem, size = 0x4, offset = 0x4, fixed_abs, tag = 'smem constant byte address 0x4 - core index']
  #allocation1 [shape = 'u32[144,128]{1,0:T(1,128)}', space=vmem, size = 0x12000, scoped, tag = 'internal scratch']
  #allocation2 [shape = 'f32[1]{0:T(128)S(6)}', space=smem, size = 0x200, scoped, tag = 'scoped memory for tpu_custom_call.1']
  #allocation3 [shape = 'f32[1]{0:T(128)S(6)}', space=smem, size = 0x200, scoped, tag = 'scoped memory for tpu_custom_call.1']
  %s0 = inlined_call_operand.<no memory space> [shape: f32[1], index: 0, kind: input, shape index: {}]
  %s1 = inlined_call_operand.<no memory space> [shape: f32[1], index: 1, kind: input, shape index: {}]
  %s2 = inlined_call_operand.hbm [shape: f32[4,512], index: 2, kind: input, shape index: {}]
  %s3 = inlined_call_operand.hbm [shape: f32[4,512], index: 3, kind: output, shape index: {}]
  %s4 = sld [smem:[#allocation0]]
  $region26: #{tpu_custom_call.1} parent=0
    _
  %s6 = ssub.s32 1, %s4
  %s7 = scalar_select 0, %s6, %s4
  %8 = sst [smem:[#allocation2]] %s0
  %9 = sst [smem:[#allocation3]] %s1
  $region1: #{tpu_custom_call.1} parent=0
    #allocation4 [shape = 'u8[8192]{0}', space=vmem, size = 0x2000, scoped, tag = 'input window, operand 2, single buffered']
    #allocation5 [shape = 's32[1]{0}', space=sflag, size = 0x4, scoped, tag = 'scoped memory for tpu_custom_call.1']
    #allocation6 [shape = 's32[1]{0}', space=sflag, size = 0x4, scoped, tag = 'scoped memory for tpu_custom_call.1']
    #allocation7 [shape = 'u8[8192]{0}', space=vmem, size = 0x2000, scoped, tag = 'output window, operand 0, single buffered']
    %10 = vsyncpa [#allocation5], 0
    %11 = vsyncpa [#allocation6], 0
    // Predicated region
    $region2: #{tpu_custom_call.1} parent=1 // pred_check
      _
    $region3: #{tpu_custom_call.1} parent=1 // pred_check_branch
      %13 = sbr.rel (0) target = $region5
    $region4: #{tpu_custom_call.1} parent=1 // pred_region
      _
    $region5: #{tpu_custom_call.1} parent=1 // pred_fallthru
      _
    // Predicated region
    $region6: #{tpu_custom_call.1} parent=1 // pred_check
      _
    $region7: #{tpu_custom_call.1} parent=1 // pred_check_branch
      %15 = sbr.rel (0) target = $region9
    $region8: #{tpu_custom_call.1} parent=1 // pred_region
      _
    $region9: #{tpu_custom_call.1} parent=1 // pred_fallthru
      _
    // Predicated region
    $region10: #{tpu_custom_call.1} parent=1 // pred_check
      _
    $region11: #{tpu_custom_call.1} parent=1 // pred_check_branch
      %17 = sbr.rel (0) target = $region13
    $region12: #{tpu_custom_call.1} parent=1 // pred_region
      %s19 = ssub.s32 256, 256
      %20 = vsyncadd [#allocation5], %s19
      %s22 = sshll.u32 [#allocation4], 4
      %s23 = int_to_ptr.vmem [resolvable:$true] %s22
      %25 = dma.hbm_to_vmem [thread:$0]  %s2, 256, %s23, [#allocation5]
    $region13: #{tpu_custom_call.1} parent=1 // pred_fallthru
      _
    // Predicated region
    $region14: #{tpu_custom_call.1} parent=1 // pred_check
      _
    $region15: #{tpu_custom_call.1} parent=1 // pred_check_branch
      %27 = sbr.rel (0) target = $region17
    $region16: #{tpu_custom_call.1} parent=1 // pred_region
      %28 = dma.done [#allocation5], 256
    $region17: #{tpu_custom_call.1} parent=1 // pred_fallthru
      _
    %s29 = sld [smem:[#allocation2]]
    %s30 = sld [smem:[#allocation3]]
    %v31 = vld [vmem:[#allocation4] sm:$0xff]
    %v32 = vld [vmem:[#allocation4 + $0x8] sm:$0xff]
    %v33 = vstv %s29
    %v34 = vmul.f32 %v33, %v31
    %v35 = vmul.f32 %v33, %v32
    %v36 = vstv %s30
    %v37 = vadd.f32 %v34, %v36
    %v38 = vadd.f32 %v35, %v36
    %39 = vst [vmem:[#allocation7] sm:$0xff] %v37
    %40 = vst [vmem:[#allocation7 + $0x8] sm:$0xff] %v38
    // Predicated region
    $region18: #{tpu_custom_call.1} parent=1 // pred_check
      _
    $region19: #{tpu_custom_call.1} parent=1 // pred_check_branch
      %42 = sbr.rel (0) target = $region21
    $region20: #{tpu_custom_call.1} parent=1 // pred_region
      %s44 = ssub.s32 256, 256
      %45 = vsyncadd [#allocation6], %s44
      %s47 = sshll.u32 [#allocation7], 4
      %s48 = int_to_ptr.vmem [resolvable:$true] %s47
      %50 = dma.vmem_to_hbm [thread:$0]  %s48, 256, %s3, [#allocation6]
    $region21: #{tpu_custom_call.1} parent=1 // pred_fallthru
      _
    // Predicated region
    $region22: #{tpu_custom_call.1} parent=1 // pred_check
      _
    $region23: #{tpu_custom_call.1} parent=1 // pred_check_branch
      %52 = sbr.rel (0) target = $region25
    $region24: #{tpu_custom_call.1} parent=1 // pred_region
      %53 = dma.done [#allocation6], 256
    $region25: #{tpu_custom_call.1} parent=1 // pred_fallthru
      _
    %54 = vsyncpa [#allocation5], 1
    %55 = vsyncpa [#allocation6], 1

</llo_original>
